<compile_context>
chip_gen: v7x
topology: tpu7x:2x2x1
jax: 0.10.0
libtpu: 0.0.40
codegen_flags: <defaults>
</compile_context>

<pallas_src>
import functools

import jax
import jax.numpy as jnp
import numpy as np
from jax import lax
from jax.experimental import pallas as pl
from jax.experimental.pallas import tpu as pltpu

_VMEM_BUDGET = 40 * 1024 * 1024   # target tile working set (fits v7x 64 MiB)
_VMEM_LIMIT = 48 * 1024 * 1024    # scoped-vmem limit handed to Mosaic


def _round_up(x, m):
    return ((x + m - 1) // m) * m


def _snn_kernel(x_ref, wt_ref, out_ref, v_ref, i_ref, cur_ref,
                *, dt, tau_m, tau_s, steps, t_chunk, unroll):
    # x_ref  : (T_CHUNK, B_BLK, D_in_pad) bf16, time-major; x_ref[j] drives
    #          recurrence step t = c*T_CHUNK + j + 1.
    # wt_ref : (D_in_pad, D_out_blk) f32, W^T (zero padded).
    # out_ref: (B_BLK, D_out_blk) f32 running first-spike time (resident in
    #          VMEM across the time-chunk grid axis).
    # v_ref / i_ref : persistent membrane / current carries (VMEM scratch).
    # cur_ref: (T_CHUNK, B_BLK, D_out_blk) staged synaptic currents.
    c = pl.program_id(2)
    no_spike = jnp.float32(steps - 1)

    @pl.when(c == 0)
    def _init():
        v_ref[...] = jnp.zeros_like(v_ref)
        i_ref[...] = jnp.zeros_like(i_ref)
        out_ref[...] = jnp.full_like(out_ref, no_spike)

    a_m = jnp.float32(1.0 - dt / tau_m)
    b_m = jnp.float32(dt / tau_m)
    a_s = jnp.float32(1.0 - dt / tau_s)

    tc, bb, d_in = x_ref.shape
    d_out = wt_ref.shape[1]

    # One MXU matmul for the whole time chunk (hoisted out of the sequential
    # recurrence), staged to VMEM so the loop below only keeps V/I/fst live.
    x_flat = x_ref[...].astype(jnp.float32).reshape(tc * bb, d_in)
    cur_ref[...] = jnp.dot(
        x_flat, wt_ref[...],
        preferred_element_type=jnp.float32).reshape(tc, bb, d_out)

    t_base = (c * t_chunk).astype(jnp.float32)

    def step(j, carry):
        V, I, fst = carry
        V = a_m * V + b_m * I
        I = a_s * I + cur_ref[j]
        spike = V > 1.0
        # Spike times are exact in f32 while steps < 2**24.  Padded timesteps
        # (global t >= steps) only touch the discarded carries; their
        # t_f >= steps keeps fst unchanged via the min() below.
        t_f = t_base + (j + 1).astype(jnp.float32)
        fst = jnp.minimum(fst, jnp.where(spike, t_f, no_spike))
        V = jnp.where(spike, 0.0, V)
        return V, I, fst

    V, I, fst = lax.fori_loop(
        0, tc, step, (v_ref[...], i_ref[...], out_ref[...]), unroll=unroll)

    v_ref[...] = V
    i_ref[...] = I
    out_ref[...] = fst


def snn_forward(x_bct, weight, *, dt, tau_m, tau_s,
                t_chunk=None, b_blk=None, d_out_blk=None):
    """x_bct: (B, input_dim, steps) PyTorch NCT layout; weight: (output_dim,
    input_dim).  Returns (B, output_dim) float32 first-spike times."""
    B, d_in, steps = x_bct.shape
    d_out = weight.shape[0]
    n_iters = steps - 1
    if n_iters <= 0:
        return jnp.full((B, d_out), float(max(steps - 1, 0)), jnp.float32)

    d_in_pad = _round_up(d_in, 128)
    d_out_pad = _round_up(d_out, 128)

    # Batch tile: 64 rows by default -> 8 f32 vregs of recurrence state per
    # 128 output lanes, enough to keep the 4 VALU slots busy despite the
    # serial V/I dependency.
    if b_blk is None:
        b_blk = min(64, _round_up(B, 8))
    b_blk = _round_up(min(b_blk, _round_up(B, 8)), 8)
    b_pad = _round_up(B, b_blk)

    # Time chunk: large enough to amortize per-grid-step pipeline overhead and
    # put the x DMA in the HBM-roofline size class.
    if t_chunk is None:
        t_chunk = 128
    t_chunk = max(1, min(int(t_chunk), n_iters))

    def vmem_bytes(tc, bb):
        x_stream = 2 * tc * bb * d_in_pad * 2       # bf16 x, double-buffered
        x_f32 = tc * bb * d_in_pad * 4              # in-kernel f32 copy -> MXU
        w_b = 2 * d_in_pad * d_out_pad * 4          # worst case double-buffer
        out_b = 2 * bb * d_out_pad * 4
        scr = (2 * bb * d_out_pad + tc * bb * d_out_pad) * 4   # V, I, cur
        return x_stream + x_f32 + w_b + out_b + scr

    # Shrink tiles until the working set fits the v7x (64 MiB VMEM) budget.
    while (vmem_bytes(t_chunk, b_blk) > _VMEM_BUDGET
           and (t_chunk > 8 or b_blk > 16)):
        if t_chunk > 8:
            t_chunk = max(8, t_chunk // 2)
        else:
            b_blk = _round_up(max(16, b_blk // 2), 8)
            b_pad = _round_up(B, b_blk)

    n_chunks = pl.cdiv(n_iters, t_chunk)
    t_pad = n_chunks * t_chunk
    b_blocks = b_pad // b_blk

    # d_out tiling: the recurrence is independent per output neuron, so d_out
    # is a free parallel axis.  Split into two blocks only when a single batch
    # block would otherwise leave the second TensorCore (v7x) idle.
    if d_out_blk is None:
        if b_blocks == 1 and d_out_pad >= 256 and d_out_pad % 256 == 0:
            d_out_blk = d_out_pad // 2
        else:
            d_out_blk = d_out_pad
    assert d_out_pad % d_out_blk == 0 and d_out_blk % 128 == 0
    n_out_blocks = d_out_pad // d_out_blk

    # Time-major, bf16 x (0/1 spike trains are exactly representable in bf16).
    # TODO(synk): a time-major producer (or an in-kernel tile transpose) would
    # remove this extra XLA HBM pass over x.
    x_t = jnp.transpose(x_bct[:, :, :n_iters], (2, 0, 1)).astype(jnp.bfloat16)
    x_t = jnp.pad(x_t, ((0, t_pad - n_iters),
                        (0, b_pad - B),
                        (0, d_in_pad - d_in)))

    w_t = jnp.transpose(weight, (1, 0)).astype(jnp.float32)
    w_t = jnp.pad(w_t, ((0, d_in_pad - d_in), (0, d_out_pad - d_out)))

    kernel = functools.partial(
        _snn_kernel, dt=float(dt), tau_m=float(tau_m), tau_s=float(tau_s),
        steps=steps, t_chunk=t_chunk, unroll=min(8, t_chunk))

    def make_call(single_buffer_w):
        w_kwargs = {"pipeline_mode": pl.Buffered(1)} if single_buffer_w else {}
        return pl.pallas_call(
            kernel,
            out_shape=jax.ShapeDtypeStruct((b_pad, d_out_pad), jnp.float32),
            grid_spec=pltpu.PrefetchScalarGridSpec(
                num_scalar_prefetch=0,
                grid=(b_blocks, n_out_blocks, n_chunks),
                in_specs=[
                    pl.BlockSpec((t_chunk, b_blk, d_in_pad),
                                 lambda b, n, c: (c, b, 0)),
                    pl.BlockSpec((d_in_pad, d_out_blk),
                                 lambda b, n, c: (0, n), **w_kwargs),
                ],
                out_specs=pl.BlockSpec((b_blk, d_out_blk),
                                       lambda b, n, c: (b, n)),
                scratch_shapes=[
                    pltpu.VMEM((b_blk, d_out_blk), jnp.float32),           # V
                    pltpu.VMEM((b_blk, d_out_blk), jnp.float32),           # I
                    pltpu.VMEM((t_chunk, b_blk, d_out_blk), jnp.float32),  # cur
                ],
            ),
            compiler_params=pltpu.CompilerParams(
                dimension_semantics=("parallel", "parallel", "arbitrary"),
                vmem_limit_bytes=_VMEM_LIMIT),
        )

    try:
        out = make_call(single_buffer_w=True)(x_t, w_t)
    except Exception:
        # Single-buffering the constant-index weight block is a pure VMEM
        # optimization; fall back if this jax version rejects pipeline_mode.
        out = make_call(single_buffer_w=False)(x_t, w_t)

    return out[:B, :d_out]


def snn_reference(x_bct, weight, *, dt, tau_m, tau_s):
    """Pure NumPy reference mirroring the PyTorch code (eval mode)."""
    x = np.asarray(x_bct, np.float32)
    w = np.asarray(weight, np.float32)
    B, d_in, steps = x.shape
    d_out = w.shape[0]
    V = np.zeros((B, d_out), np.float32)
    I = np.zeros((B, d_out), np.float32)
    out = np.zeros((B, d_out, steps), np.float32)
    for i in range(1, steps):
        V = (1.0 - dt / tau_m) * V + (dt / tau_m) * I
        I = (1.0 - dt / tau_s) * I + x[:, :, i - 1] @ w.T
        spikes = (V > 1.0).astype(np.float32)
        out[:, :, i] = spikes
        V = (1.0 - spikes) * V
    idx = np.arange(steps, 0, -1, dtype=np.float32)[None, None, :]
    fst = np.argmax(idx * out, axis=2).astype(np.float32)
    fst[fst == 0] = steps - 1
    return fst


if __name__ == "__main__":
    def run_case(key, B, d_in, d_out, T, dt, tau_m, tau_s, **kw):
        k_w, k_x = jax.random.split(key)
        steps = int(T / dt)
        # nn.init.normal_(weight, 0.1, 0.1), then quantized to multiples of
        # 1/64: every matmul partial sum is then exact in f32 (and bf16 MXU
        # passes), so the integer first-spike times are bit-identical to the
        # NumPy reference irrespective of summation order.
        w = 0.1 + 0.1 * jax.random.normal(k_w, (d_out, d_in), jnp.float32)
        w = jnp.round(w * 64.0) / 64.0
        # Binary input spike train, PyTorch layout (B, input_dim, steps).
        x = jax.random.bernoulli(k_x, 0.5, (B, d_in, steps)).astype(jnp.float32)

        out = jax.block_until_ready(
            snn_forward(x, w, dt=dt, tau_m=tau_m, tau_s=tau_s, **kw))
        ref = snn_reference(np.array(x), np.array(w),
                            dt=dt, tau_m=tau_m, tau_s=tau_s)
        np.testing.assert_array_equal(np.array(out), ref)

    key = jax.random.PRNGKey(0)
    k1, k2 = jax.random.split(key)

    # Module-sized case: B=2, input_dim=32, output_dim=16, T=8, dt=1.
    run_case(k1, B=2, d_in=32, d_out=16, T=8.0, dt=1.0, tau_m=4.0, tau_s=2.0)
    # Multi-chunk + split-d_out case: exercises the carried time axis (4
    # chunks of 8 steps) and the v7x-oriented d_out parallel axis (2 blocks).
    run_case(k2, B=2, d_in=32, d_out=129, T=33.0, dt=1.0, tau_m=4.0, tau_s=2.0,
             t_chunk=8)

    # TODO(synk): the training-time silent-neuron weight bump (the `while True`
    # retry mutating self.weight), the custom backward passes and SpikeCELoss
    # are training-only and not part of the eval forward implemented here.
    print("KERNEL_OK")
</pallas_src>

<mosaic_0001>
module attributes {stable_mosaic.version = 11 : i64} {
  func.func @_snn_kernel(%arg0: i32, %arg1: i32, %arg2: i32, %arg3: memref<7x8x128xbf16, #tpu.memory_space<vmem>>, %arg4: memref<128x128xf32, #tpu.memory_space<vmem>>, %arg5: memref<8x128xf32, #tpu.memory_space<vmem>>, %arg6: memref<8x128xf32, #tpu.memory_space<vmem>>, %arg7: memref<8x128xf32, #tpu.memory_space<vmem>>, %arg8: memref<7x8x128xf32, #tpu.memory_space<vmem>>) attributes {dimension_semantics = [#tpu.dimension_semantics<parallel>, #tpu.dimension_semantics<parallel>, #tpu.dimension_semantics<arbitrary>], iteration_bounds = array<i64: 1, 1, 1>, scalar_prefetch = 0 : i64, scratch_operands = 3 : i64, tpu.core_type = #tpu.core_type<tc>, window_params = [{transform_indices = @transform_0, window_bounds = array<i64: 7, 8, 128>}, {pipeline_mode = #tpu.pipeline_mode<synchronous>, transform_indices = @transform_1, window_bounds = array<i64: 128, 128>}, {transform_indices = @transform_2, window_bounds = array<i64: 8, 128>}]} {
    %c0_i32 = arith.constant 0 : i32
    %0 = arith.cmpi eq, %arg2, %c0_i32 : i32
    %1 = arith.extui %0 : i1 to i32
    %cst = arith.constant 7.000000e+00 : f32
    %c0_i32_0 = arith.constant 0 : i32
    %2 = arith.cmpi ne, %1, %c0_i32_0 : i32
    scf.if %2 {
      %cst_62 = arith.constant 0.000000e+00 : f32
      %172 = vector.broadcast %cst_62 : f32 to vector<8x128xf32>
      %c0_63 = arith.constant 0 : index
      %c0_64 = arith.constant 0 : index
      %173 = vector.load %arg6[%c0_63, %c0_64] : memref<8x128xf32, #tpu.memory_space<vmem>>, vector<8x128xf32>
      tpu.vector_store %arg6[%c0_63, %c0_64], %172 {strides = array<i32>} : memref<8x128xf32, #tpu.memory_space<vmem>>, vector<8x128xf32>,
      %cst_65 = arith.constant 0.000000e+00 : f32
      %174 = vector.broadcast %cst_65 : f32 to vector<8x128xf32>
      %c0_66 = arith.constant 0 : index
      %c0_67 = arith.constant 0 : index
      %175 = vector.load %arg7[%c0_66, %c0_67] : memref<8x128xf32, #tpu.memory_space<vmem>>, vector<8x128xf32>
      tpu.vector_store %arg7[%c0_66, %c0_67], %174 {strides = array<i32>} : memref<8x128xf32, #tpu.memory_space<vmem>>, vector<8x128xf32>,
      %176 = vector.broadcast %cst : f32 to vector<8x128xf32>
      %c0_68 = arith.constant 0 : index
      %c0_69 = arith.constant 0 : index
      %177 = vector.load %arg5[%c0_68, %c0_69] : memref<8x128xf32, #tpu.memory_space<vmem>>, vector<8x128xf32>
      tpu.vector_store %arg5[%c0_68, %c0_69], %176 {strides = array<i32>} : memref<8x128xf32, #tpu.memory_space<vmem>>, vector<8x128xf32>,
    } else {
    }
    %c0 = arith.constant 0 : index
    %c0_1 = arith.constant 0 : index
    %c0_2 = arith.constant 0 : index
    %3 = vector.load %arg3[%c0, %c0_1, %c0_2] : memref<7x8x128xbf16, #tpu.memory_space<vmem>>, vector<7x8x128xbf16>
    %4 = arith.extf %3 : vector<7x8x128xbf16> to vector<7x8x128xf32>
    %5 = vector.shape_cast %4 : vector<7x8x128xf32> to vector<56x128xf32>
    %c0_3 = arith.constant 0 : index
    %c0_4 = arith.constant 0 : index
    %6 = vector.load %arg4[%c0_3, %c0_4] : memref<128x128xf32, #tpu.memory_space<vmem>>, vector<128x128xf32>
    %cst_5 = arith.constant dense<0.000000e+00> : vector<56x128xf32>
    %7 = tpu.matmul %5, %6, %cst_5 {dimension_numbers = #tpu.dot_dimension_numbers<[1], [0], [0], [1], [0, 0, 1, 1], [], []>} : vector<56x128xf32>, vector<128x128xf32>, vector<56x128xf32> -> vector<56x128xf32>
    %8 = vector.shape_cast %7 : vector<56x128xf32> to vector<7x8x128xf32>
    %c0_6 = arith.constant 0 : index
    %c0_7 = arith.constant 0 : index
    %c0_8 = arith.constant 0 : index
    %9 = vector.load %arg8[%c0_6, %c0_7, %c0_8] : memref<7x8x128xf32, #tpu.memory_space<vmem>>, vector<7x8x128xf32>
    tpu.vector_store %arg8[%c0_6, %c0_7, %c0_8], %8 {strides = array<i32>} : memref<7x8x128xf32, #tpu.memory_space<vmem>>, vector<7x8x128xf32>,
    %c7_i32 = arith.constant 7 : i32
    %10 = arith.muli %arg2, %c7_i32 : i32
    %11 = arith.sitofp %10 : i32 to f32
    %c0_9 = arith.constant 0 : index
    %c0_10 = arith.constant 0 : index
    %12 = vector.load %arg6[%c0_9, %c0_10] : memref<8x128xf32, #tpu.memory_space<vmem>>, vector<8x128xf32>
    %c0_11 = arith.constant 0 : index
    %c0_12 = arith.constant 0 : index
    %13 = vector.load %arg7[%c0_11, %c0_12] : memref<8x128xf32, #tpu.memory_space<vmem>>, vector<8x128xf32>
    %c0_13 = arith.constant 0 : index
    %c0_14 = arith.constant 0 : index
    %14 = vector.load %arg5[%c0_13, %c0_14] : memref<8x128xf32, #tpu.memory_space<vmem>>, vector<8x128xf32>
    %cst_15 = arith.constant 7.500000e-01 : f32
    %cst_16 = arith.constant 2.500000e-01 : f32
    %cst_17 = arith.constant 5.000000e-01 : f32
    %cst_18 = arith.constant 7.000000e+00 : f32
    %c0_i32_19 = arith.constant 0 : i32
    %15 = vector.broadcast %cst_15 : f32 to vector<8x128xf32>
    %16 = arith.mulf %15, %12 : vector<8x128xf32>
    %17 = vector.broadcast %cst_16 : f32 to vector<8x128xf32>
    %18 = arith.mulf %17, %13 : vector<8x128xf32>
    %19 = arith.addf %16, %18 : vector<8x128xf32>
    %20 = vector.broadcast %cst_17 : f32 to vector<8x128xf32>
    %21 = arith.mulf %20, %13 : vector<8x128xf32>
    %22 = arith.index_cast %c0_i32_19 : i32 to index
    %c0_20 = arith.constant 0 : index
    %c0_21 = arith.constant 0 : index
    %23 = vector.load %arg8[%22, %c0_20, %c0_21] : memref<7x8x128xf32, #tpu.memory_space<vmem>>, vector<1x8x128xf32>
    %24 = vector.shape_cast %23 : vector<1x8x128xf32> to vector<8x128xf32>
    %25 = arith.addf %21, %24 : vector<8x128xf32>
    %cst_22 = arith.constant 1.000000e+00 : f32
    %26 = vector.broadcast %cst_22 : f32 to vector<8x128xf32>
    %27 = arith.cmpf ogt, %19, %26 : vector<8x128xf32>
    %c1_i32 = arith.constant 1 : i32
    %28 = arith.addi %c0_i32_19, %c1_i32 : i32
    %29 = arith.sitofp %28 : i32 to f32
    %30 = arith.addf %11, %29 : f32
    %31 = vector.broadcast %30 : f32 to vector<8x128xf32>
    %32 = vector.broadcast %cst_18 : f32 to vector<8x128xf32>
    %33 = arith.select %27, %31, %32 : vector<8x128xi1>, vector<8x128xf32>
    %34 = arith.minimumf %14, %33 : vector<8x128xf32>
    %cst_23 = arith.constant 0.000000e+00 : f32
    %35 = vector.broadcast %cst_23 : f32 to vector<8x128xf32>
    %36 = arith.select %27, %35, %19 : vector<8x128xi1>, vector<8x128xf32>
    %c1_i32_24 = arith.constant 1 : i32
    %37 = vector.broadcast %cst_15 : f32 to vector<8x128xf32>
    %38 = arith.mulf %37, %36 : vector<8x128xf32>
    %39 = vector.broadcast %cst_16 : f32 to vector<8x128xf32>
    %40 = arith.mulf %39, %25 : vector<8x128xf32>
    %41 = arith.addf %38, %40 : vector<8x128xf32>
    %42 = vector.broadcast %cst_17 : f32 to vector<8x128xf32>
    %43 = arith.mulf %42, %25 : vector<8x128xf32>
    %44 = arith.index_cast %c1_i32_24 : i32 to index
    %c0_25 = arith.constant 0 : index
    %c0_26 = arith.constant 0 : index
    %45 = vector.load %arg8[%44, %c0_25, %c0_26] : memref<7x8x128xf32, #tpu.memory_space<vmem>>, vector<1x8x128xf32>
    %46 = vector.shape_cast %45 : vector<1x8x128xf32> to vector<8x128xf32>
    %47 = arith.addf %43, %46 : vector<8x128xf32>
    %cst_27 = arith.constant 1.000000e+00 : f32
    %48 = vector.broadcast %cst_27 : f32 to vector<8x128xf32>
    %49 = arith.cmpf ogt, %41, %48 : vector<8x128xf32>
    %c1_i32_28 = arith.constant 1 : i32
    %50 = arith.addi %c1_i32_24, %c1_i32_28 : i32
    %51 = arith.sitofp %50 : i32 to f32
    %52 = arith.addf %11, %51 : f32
    %53 = vector.broadcast %52 : f32 to vector<8x128xf32>
    %54 = vector.broadcast %cst_18 : f32 to vector<8x128xf32>
    %55 = arith.select %49, %53, %54 : vector<8x128xi1>, vector<8x128xf32>
    %56 = arith.minimumf %34, %55 : vector<8x128xf32>
    %cst_29 = arith.constant 0.000000e+00 : f32
    %57 = vector.broadcast %cst_29 : f32 to vector<8x128xf32>
    %58 = arith.select %49, %57, %41 : vector<8x128xi1>, vector<8x128xf32>
    %c2_i32 = arith.constant 2 : i32
    %59 = vector.broadcast %cst_15 : f32 to vector<8x128xf32>
    %60 = arith.mulf %59, %58 : vector<8x128xf32>
    %61 = vector.broadcast %cst_16 : f32 to vector<8x128xf32>
    %62 = arith.mulf %61, %47 : vector<8x128xf32>
    %63 = arith.addf %60, %62 : vector<8x128xf32>
    %64 = vector.broadcast %cst_17 : f32 to vector<8x128xf32>
    %65 = arith.mulf %64, %47 : vector<8x128xf32>
    %66 = arith.index_cast %c2_i32 : i32 to index
    %c0_30 = arith.constant 0 : index
    %c0_31 = arith.constant 0 : index
    %67 = vector.load %arg8[%66, %c0_30, %c0_31] : memref<7x8x128xf32, #tpu.memory_space<vmem>>, vector<1x8x128xf32>
    %68 = vector.shape_cast %67 : vector<1x8x128xf32> to vector<8x128xf32>
    %69 = arith.addf %65, %68 : vector<8x128xf32>
    %cst_32 = arith.constant 1.000000e+00 : f32
    %70 = vector.broadcast %cst_32 : f32 to vector<8x128xf32>
    %71 = arith.cmpf ogt, %63, %70 : vector<8x128xf32>
    %c1_i32_33 = arith.constant 1 : i32
    %72 = arith.addi %c2_i32, %c1_i32_33 : i32
    %73 = arith.sitofp %72 : i32 to f32
    %74 = arith.addf %11, %73 : f32
    %75 = vector.broadcast %74 : f32 to vector<8x128xf32>
    %76 = vector.broadcast %cst_18 : f32 to vector<8x128xf32>
    %77 = arith.select %71, %75, %76 : vector<8x128xi1>, vector<8x128xf32>
    %78 = arith.minimumf %56, %77 : vector<8x128xf32>
    %cst_34 = arith.constant 0.000000e+00 : f32
    %79 = vector.broadcast %cst_34 : f32 to vector<8x128xf32>
    %80 = arith.select %71, %79, %63 : vector<8x128xi1>, vector<8x128xf32>
    %c3_i32 = arith.constant 3 : i32
    %81 = vector.broadcast %cst_15 : f32 to vector<8x128xf32>
    %82 = arith.mulf %81, %80 : vector<8x128xf32>
    %83 = vector.broadcast %cst_16 : f32 to vector<8x128xf32>
    %84 = arith.mulf %83, %69 : vector<8x128xf32>
    %85 = arith.addf %82, %84 : vector<8x128xf32>
    %86 = vector.broadcast %cst_17 : f32 to vector<8x128xf32>
    %87 = arith.mulf %86, %69 : vector<8x128xf32>
    %88 = arith.index_cast %c3_i32 : i32 to index
    %c0_35 = arith.constant 0 : index
    %c0_36 = arith.constant 0 : index
    %89 = vector.load %arg8[%88, %c0_35, %c0_36] : memref<7x8x128xf32, #tpu.memory_space<vmem>>, vector<1x8x128xf32>
    %90 = vector.shape_cast %89 : vector<1x8x128xf32> to vector<8x128xf32>
    %91 = arith.addf %87, %90 : vector<8x128xf32>
    %cst_37 = arith.constant 1.000000e+00 : f32
    %92 = vector.broadcast %cst_37 : f32 to vector<8x128xf32>
    %93 = arith.cmpf ogt, %85, %92 : vector<8x128xf32>
    %c1_i32_38 = arith.constant 1 : i32
    %94 = arith.addi %c3_i32, %c1_i32_38 : i32
    %95 = arith.sitofp %94 : i32 to f32
    %96 = arith.addf %11, %95 : f32
    %97 = vector.broadcast %96 : f32 to vector<8x128xf32>
    %98 = vector.broadcast %cst_18 : f32 to vector<8x128xf32>
    %99 = arith.select %93, %97, %98 : vector<8x128xi1>, vector<8x128xf32>
    %100 = arith.minimumf %78, %99 : vector<8x128xf32>
    %cst_39 = arith.constant 0.000000e+00 : f32
    %101 = vector.broadcast %cst_39 : f32 to vector<8x128xf32>
    %102 = arith.select %93, %101, %85 : vector<8x128xi1>, vector<8x128xf32>
    %c4_i32 = arith.constant 4 : i32
    %103 = vector.broadcast %cst_15 : f32 to vector<8x128xf32>
    %104 = arith.mulf %103, %102 : vector<8x128xf32>
    %105 = vector.broadcast %cst_16 : f32 to vector<8x128xf32>
    %106 = arith.mulf %105, %91 : vector<8x128xf32>
    %107 = arith.addf %104, %106 : vector<8x128xf32>
    %108 = vector.broadcast %cst_17 : f32 to vector<8x128xf32>
    %109 = arith.mulf %108, %91 : vector<8x128xf32>
    %110 = arith.index_cast %c4_i32 : i32 to index
    %c0_40 = arith.constant 0 : index
    %c0_41 = arith.constant 0 : index
    %111 = vector.load %arg8[%110, %c0_40, %c0_41] : memref<7x8x128xf32, #tpu.memory_space<vmem>>, vector<1x8x128xf32>
    %112 = vector.shape_cast %111 : vector<1x8x128xf32> to vector<8x128xf32>
    %113 = arith.addf %109, %112 : vector<8x128xf32>
    %cst_42 = arith.constant 1.000000e+00 : f32
    %114 = vector.broadcast %cst_42 : f32 to vector<8x128xf32>
    %115 = arith.cmpf ogt, %107, %114 : vector<8x128xf32>
    %c1_i32_43 = arith.constant 1 : i32
    %116 = arith.addi %c4_i32, %c1_i32_43 : i32
    %117 = arith.sitofp %116 : i32 to f32
    %118 = arith.addf %11, %117 : f32
    %119 = vector.broadcast %118 : f32 to vector<8x128xf32>
    %120 = vector.broadcast %cst_18 : f32 to vector<8x128xf32>
    %121 = arith.select %115, %119, %120 : vector<8x128xi1>, vector<8x128xf32>
    %122 = arith.minimumf %100, %121 : vector<8x128xf32>
    %cst_44 = arith.constant 0.000000e+00 : f32
    %123 = vector.broadcast %cst_44 : f32 to vector<8x128xf32>
    %124 = arith.select %115, %123, %107 : vector<8x128xi1>, vector<8x128xf32>
    %c5_i32 = arith.constant 5 : i32
    %125 = vector.broadcast %cst_15 : f32 to vector<8x128xf32>
    %126 = arith.mulf %125, %124 : vector<8x128xf32>
    %127 = vector.broadcast %cst_16 : f32 to vector<8x128xf32>
    %128 = arith.mulf %127, %113 : vector<8x128xf32>
    %129 = arith.addf %126, %128 : vector<8x128xf32>
    %130 = vector.broadcast %cst_17 : f32 to vector<8x128xf32>
    %131 = arith.mulf %130, %113 : vector<8x128xf32>
    %132 = arith.index_cast %c5_i32 : i32 to index
    %c0_45 = arith.constant 0 : index
    %c0_46 = arith.constant 0 : index
    %133 = vector.load %arg8[%132, %c0_45, %c0_46] : memref<7x8x128xf32, #tpu.memory_space<vmem>>, vector<1x8x128xf32>
    %134 = vector.shape_cast %133 : vector<1x8x128xf32> to vector<8x128xf32>
    %135 = arith.addf %131, %134 : vector<8x128xf32>
    %cst_47 = arith.constant 1.000000e+00 : f32
    %136 = vector.broadcast %cst_47 : f32 to vector<8x128xf32>
    %137 = arith.cmpf ogt, %129, %136 : vector<8x128xf32>
    %c1_i32_48 = arith.constant 1 : i32
    %138 = arith.addi %c5_i32, %c1_i32_48 : i32
    %139 = arith.sitofp %138 : i32 to f32
    %140 = arith.addf %11, %139 : f32
    %141 = vector.broadcast %140 : f32 to vector<8x128xf32>
    %142 = vector.broadcast %cst_18 : f32 to vector<8x128xf32>
    %143 = arith.select %137, %141, %142 : vector<8x128xi1>, vector<8x128xf32>
    %144 = arith.minimumf %122, %143 : vector<8x128xf32>
    %cst_49 = arith.constant 0.000000e+00 : f32
    %145 = vector.broadcast %cst_49 : f32 to vector<8x128xf32>
    %146 = arith.select %137, %145, %129 : vector<8x128xi1>, vector<8x128xf32>
    %c6_i32 = arith.constant 6 : i32
    %147 = vector.broadcast %cst_15 : f32 to vector<8x128xf32>
    %148 = arith.mulf %147, %146 : vector<8x128xf32>
    %149 = vector.broadcast %cst_16 : f32 to vector<8x128xf32>
    %150 = arith.mulf %149, %135 : vector<8x128xf32>
    %151 = arith.addf %148, %150 : vector<8x128xf32>
    %152 = vector.broadcast %cst_17 : f32 to vector<8x128xf32>
    %153 = arith.mulf %152, %135 : vector<8x128xf32>
    %154 = arith.index_cast %c6_i32 : i32 to index
    %c0_50 = arith.constant 0 : index
    %c0_51 = arith.constant 0 : index
    %155 = vector.load %arg8[%154, %c0_50, %c0_51] : memref<7x8x128xf32, #tpu.memory_space<vmem>>, vector<1x8x128xf32>
    %156 = vector.shape_cast %155 : vector<1x8x128xf32> to vector<8x128xf32>
    %157 = arith.addf %153, %156 : vector<8x128xf32>
    %cst_52 = arith.constant 1.000000e+00 : f32
    %158 = vector.broadcast %cst_52 : f32 to vector<8x128xf32>
    %159 = arith.cmpf ogt, %151, %158 : vector<8x128xf32>
    %c1_i32_53 = arith.constant 1 : i32
    %160 = arith.addi %c6_i32, %c1_i32_53 : i32
    %161 = arith.sitofp %160 : i32 to f32
    %162 = arith.addf %11, %161 : f32
    %163 = vector.broadcast %162 : f32 to vector<8x128xf32>
    %164 = vector.broadcast %cst_18 : f32 to vector<8x128xf32>
    %165 = arith.select %159, %163, %164 : vector<8x128xi1>, vector<8x128xf32>
    %166 = arith.minimumf %144, %165 : vector<8x128xf32>
    %cst_54 = arith.constant 0.000000e+00 : f32
    %167 = vector.broadcast %cst_54 : f32 to vector<8x128xf32>
    %168 = arith.select %159, %167, %151 : vector<8x128xi1>, vector<8x128xf32>
    %c7_i32_55 = arith.constant 7 : i32
    %c0_56 = arith.constant 0 : index
    %c0_57 = arith.constant 0 : index
    %169 = vector.load %arg6[%c0_56, %c0_57] : memref<8x128xf32, #tpu.memory_space<vmem>>, vector<8x128xf32>
    tpu.vector_store %arg6[%c0_56, %c0_57], %168 {strides = array<i32>} : memref<8x128xf32, #tpu.memory_space<vmem>>, vector<8x128xf32>,
    %c0_58 = arith.constant 0 : index
    %c0_59 = arith.constant 0 : index
    %170 = vector.load %arg7[%c0_58, %c0_59] : memref<8x128xf32, #tpu.memory_space<vmem>>, vector<8x128xf32>
    tpu.vector_store %arg7[%c0_58, %c0_59], %157 {strides = array<i32>} : memref<8x128xf32, #tpu.memory_space<vmem>>, vector<8x128xf32>,
    %c0_60 = arith.constant 0 : index
    %c0_61 = arith.constant 0 : index
    %171 = vector.load %arg5[%c0_60, %c0_61] : memref<8x128xf32, #tpu.memory_space<vmem>>, vector<8x128xf32>
    tpu.vector_store %arg5[%c0_60, %c0_61], %166 {strides = array<i32>} : memref<8x128xf32, #tpu.memory_space<vmem>>, vector<8x128xf32>,
    return
  }
  func.func @transform_0(%arg0: i32, %arg1: i32, %arg2: i32) -> (i32, i32, i32) {
    %c0_i32 = arith.constant 0 : i32
    %c0_i32_0 = arith.constant 0 : i32
    return %arg2, %arg0, %c0_i32 : i32, i32, i32
  }
  func.func @transform_1(%arg0: i32, %arg1: i32, %arg2: i32) -> (i32, i32) {
    %c0_i32 = arith.constant 0 : i32
    %c0_i32_0 = arith.constant 0 : i32
    return %c0_i32, %arg1 : i32, i32
  }
  func.func @transform_2(%arg0: i32, %arg1: i32, %arg2: i32) -> (i32, i32) {
    %c0_i32 = arith.constant 0 : i32
    return %arg0, %arg1 : i32, i32
  }
}

module attributes {stable_mosaic.version = 11 : i64} {
  func.func @_snn_kernel(%arg0: i32, %arg1: i32, %arg2: i32, %arg3: memref<7x8x128xbf16, #tpu.memory_space<vmem>>, %arg4: memref<128x128xf32, #tpu.memory_space<vmem>>, %arg5: memref<8x128xf32, #tpu.memory_space<vmem>>, %arg6: memref<8x128xf32, #tpu.memory_space<vmem>>, %arg7: memref<8x128xf32, #tpu.memory_space<vmem>>, %arg8: memref<7x8x128xf32, #tpu.memory_space<vmem>>) attributes {dimension_semantics = [#tpu.dimension_semantics<parallel>, #tpu.dimension_semantics<parallel>, #tpu.dimension_semantics<arbitrary>], iteration_bounds = array<i64: 1, 1, 1>, scalar_prefetch = 0 : i64, scratch_operands = 3 : i64, tpu.core_type = #tpu.core_type<tc>, window_params = [{transform_indices = @transform_0, window_bounds = array<i64: 7, 8, 128>}, {transform_indices = @transform_1, window_bounds = array<i64: 128, 128>}, {transform_indices = @transform_2, window_bounds = array<i64: 8, 128>}]} {
    %c0_i32 = arith.constant 0 : i32
    %0 = arith.cmpi eq, %arg2, %c0_i32 : i32
    %1 = arith.extui %0 : i1 to i32
    %cst = arith.constant 7.000000e+00 : f32
    %c0_i32_0 = arith.constant 0 : i32
    %2 = arith.cmpi ne, %1, %c0_i32_0 : i32
    scf.if %2 {
      %cst_62 = arith.constant 0.000000e+00 : f32
      %172 = vector.broadcast %cst_62 : f32 to vector<8x128xf32>
      %c0_63 = arith.constant 0 : index
      %c0_64 = arith.constant 0 : index
      %173 = vector.load %arg6[%c0_63, %c0_64] : memref<8x128xf32, #tpu.memory_space<vmem>>, vector<8x128xf32>
      tpu.vector_store %arg6[%c0_63, %c0_64], %172 {strides = array<i32>} : memref<8x128xf32, #tpu.memory_space<vmem>>, vector<8x128xf32>,
      %cst_65 = arith.constant 0.000000e+00 : f32
      %174 = vector.broadcast %cst_65 : f32 to vector<8x128xf32>
      %c0_66 = arith.constant 0 : index
      %c0_67 = arith.constant 0 : index
      %175 = vector.load %arg7[%c0_66, %c0_67] : memref<8x128xf32, #tpu.memory_space<vmem>>, vector<8x128xf32>
      tpu.vector_store %arg7[%c0_66, %c0_67], %174 {strides = array<i32>} : memref<8x128xf32, #tpu.memory_space<vmem>>, vector<8x128xf32>,
      %176 = vector.broadcast %cst : f32 to vector<8x128xf32>
      %c0_68 = arith.constant 0 : index
      %c0_69 = arith.constant 0 : index
      %177 = vector.load %arg5[%c0_68, %c0_69] : memref<8x128xf32, #tpu.memory_space<vmem>>, vector<8x128xf32>
      tpu.vector_store %arg5[%c0_68, %c0_69], %176 {strides = array<i32>} : memref<8x128xf32, #tpu.memory_space<vmem>>, vector<8x128xf32>,
    } else {
    }
    %c0 = arith.constant 0 : index
    %c0_1 = arith.constant 0 : index
    %c0_2 = arith.constant 0 : index
    %3 = vector.load %arg3[%c0, %c0_1, %c0_2] : memref<7x8x128xbf16, #tpu.memory_space<vmem>>, vector<7x8x128xbf16>
    %4 = arith.extf %3 : vector<7x8x128xbf16> to vector<7x8x128xf32>
    %5 = vector.shape_cast %4 : vector<7x8x128xf32> to vector<56x128xf32>
    %c0_3 = arith.constant 0 : index
    %c0_4 = arith.constant 0 : index
    %6 = vector.load %arg4[%c0_3, %c0_4] : memref<128x128xf32, #tpu.memory_space<vmem>>, vector<128x128xf32>
    %cst_5 = arith.constant dense<0.000000e+00> : vector<56x128xf32>
    %7 = tpu.matmul %5, %6, %cst_5 {dimension_numbers = #tpu.dot_dimension_numbers<[1], [0], [0], [1], [0, 0, 1, 1], [], []>} : vector<56x128xf32>, vector<128x128xf32>, vector<56x128xf32> -> vector<56x128xf32>
    %8 = vector.shape_cast %7 : vector<56x128xf32> to vector<7x8x128xf32>
    %c0_6 = arith.constant 0 : index
    %c0_7 = arith.constant 0 : index
    %c0_8 = arith.constant 0 : index
    %9 = vector.load %arg8[%c0_6, %c0_7, %c0_8] : memref<7x8x128xf32, #tpu.memory_space<vmem>>, vector<7x8x128xf32>
    tpu.vector_store %arg8[%c0_6, %c0_7, %c0_8], %8 {strides = array<i32>} : memref<7x8x128xf32, #tpu.memory_space<vmem>>, vector<7x8x128xf32>,
    %c7_i32 = arith.constant 7 : i32
    %10 = arith.muli %arg2, %c7_i32 : i32
    %11 = arith.sitofp %10 : i32 to f32
    %c0_9 = arith.constant 0 : index
    %c0_10 = arith.constant 0 : index
    %12 = vector.load %arg6[%c0_9, %c0_10] : memref<8x128xf32, #tpu.memory_space<vmem>>, vector<8x128xf32>
    %c0_11 = arith.constant 0 : index
    %c0_12 = arith.constant 0 : index
    %13 = vector.load %arg7[%c0_11, %c0_12] : memref<8x128xf32, #tpu.memory_space<vmem>>, vector<8x128xf32>
    %c0_13 = arith.constant 0 : index
    %c0_14 = arith.constant 0 : index
    %14 = vector.load %arg5[%c0_13, %c0_14] : memref<8x128xf32, #tpu.memory_space<vmem>>, vector<8x128xf32>
    %cst_15 = arith.constant 7.500000e-01 : f32
    %cst_16 = arith.constant 2.500000e-01 : f32
    %cst_17 = arith.constant 5.000000e-01 : f32
    %cst_18 = arith.constant 7.000000e+00 : f32
    %c0_i32_19 = arith.constant 0 : i32
    %15 = vector.broadcast %cst_15 : f32 to vector<8x128xf32>
    %16 = arith.mulf %15, %12 : vector<8x128xf32>
    %17 = vector.broadcast %cst_16 : f32 to vector<8x128xf32>
    %18 = arith.mulf %17, %13 : vector<8x128xf32>
    %19 = arith.addf %16, %18 : vector<8x128xf32>
    %20 = vector.broadcast %cst_17 : f32 to vector<8x128xf32>
    %21 = arith.mulf %20, %13 : vector<8x128xf32>
    %22 = arith.index_cast %c0_i32_19 : i32 to index
    %c0_20 = arith.constant 0 : index
    %c0_21 = arith.constant 0 : index
    %23 = vector.load %arg8[%22, %c0_20, %c0_21] : memref<7x8x128xf32, #tpu.memory_space<vmem>>, vector<1x8x128xf32>
    %24 = vector.shape_cast %23 : vector<1x8x128xf32> to vector<8x128xf32>
    %25 = arith.addf %21, %24 : vector<8x128xf32>
    %cst_22 = arith.constant 1.000000e+00 : f32
    %26 = vector.broadcast %cst_22 : f32 to vector<8x128xf32>
    %27 = arith.cmpf ogt, %19, %26 : vector<8x128xf32>
    %c1_i32 = arith.constant 1 : i32
    %28 = arith.addi %c0_i32_19, %c1_i32 : i32
    %29 = arith.sitofp %28 : i32 to f32
    %30 = arith.addf %11, %29 : f32
    %31 = vector.broadcast %30 : f32 to vector<8x128xf32>
    %32 = vector.broadcast %cst_18 : f32 to vector<8x128xf32>
    %33 = arith.select %27, %31, %32 : vector<8x128xi1>, vector<8x128xf32>
    %34 = arith.minimumf %14, %33 : vector<8x128xf32>
    %cst_23 = arith.constant 0.000000e+00 : f32
    %35 = vector.broadcast %cst_23 : f32 to vector<8x128xf32>
    %36 = arith.select %27, %35, %19 : vector<8x128xi1>, vector<8x128xf32>
    %c1_i32_24 = arith.constant 1 : i32
    %37 = vector.broadcast %cst_15 : f32 to vector<8x128xf32>
    %38 = arith.mulf %37, %36 : vector<8x128xf32>
    %39 = vector.broadcast %cst_16 : f32 to vector<8x128xf32>
    %40 = arith.mulf %39, %25 : vector<8x128xf32>
    %41 = arith.addf %38, %40 : vector<8x128xf32>
    %42 = vector.broadcast %cst_17 : f32 to vector<8x128xf32>
    %43 = arith.mulf %42, %25 : vector<8x128xf32>
    %44 = arith.index_cast %c1_i32_24 : i32 to index
    %c0_25 = arith.constant 0 : index
    %c0_26 = arith.constant 0 : index
    %45 = vector.load %arg8[%44, %c0_25, %c0_26] : memref<7x8x128xf32, #tpu.memory_space<vmem>>, vector<1x8x128xf32>
    %46 = vector.shape_cast %45 : vector<1x8x128xf32> to vector<8x128xf32>
    %47 = arith.addf %43, %46 : vector<8x128xf32>
    %cst_27 = arith.constant 1.000000e+00 : f32
    %48 = vector.broadcast %cst_27 : f32 to vector<8x128xf32>
    %49 = arith.cmpf ogt, %41, %48 : vector<8x128xf32>
    %c1_i32_28 = arith.constant 1 : i32
    %50 = arith.addi %c1_i32_24, %c1_i32_28 : i32
    %51 = arith.sitofp %50 : i32 to f32
    %52 = arith.addf %11, %51 : f32
    %53 = vector.broadcast %52 : f32 to vector<8x128xf32>
    %54 = vector.broadcast %cst_18 : f32 to vector<8x128xf32>
    %55 = arith.select %49, %53, %54 : vector<8x128xi1>, vector<8x128xf32>
    %56 = arith.minimumf %34, %55 : vector<8x128xf32>
    %cst_29 = arith.constant 0.000000e+00 : f32
    %57 = vector.broadcast %cst_29 : f32 to vector<8x128xf32>
    %58 = arith.select %49, %57, %41 : vector<8x128xi1>, vector<8x128xf32>
    %c2_i32 = arith.constant 2 : i32
    %59 = vector.broadcast %cst_15 : f32 to vector<8x128xf32>
    %60 = arith.mulf %59, %58 : vector<8x128xf32>
    %61 = vector.broadcast %cst_16 : f32 to vector<8x128xf32>
    %62 = arith.mulf %61, %47 : vector<8x128xf32>
    %63 = arith.addf %60, %62 : vector<8x128xf32>
    %64 = vector.broadcast %cst_17 : f32 to vector<8x128xf32>
    %65 = arith.mulf %64, %47 : vector<8x128xf32>
    %66 = arith.index_cast %c2_i32 : i32 to index
    %c0_30 = arith.constant 0 : index
    %c0_31 = arith.constant 0 : index
    %67 = vector.load %arg8[%66, %c0_30, %c0_31] : memref<7x8x128xf32, #tpu.memory_space<vmem>>, vector<1x8x128xf32>
    %68 = vector.shape_cast %67 : vector<1x8x128xf32> to vector<8x128xf32>
    %69 = arith.addf %65, %68 : vector<8x128xf32>
    %cst_32 = arith.constant 1.000000e+00 : f32
    %70 = vector.broadcast %cst_32 : f32 to vector<8x128xf32>
    %71 = arith.cmpf ogt, %63, %70 : vector<8x128xf32>
    %c1_i32_33 = arith.constant 1 : i32
    %72 = arith.addi %c2_i32, %c1_i32_33 : i32
    %73 = arith.sitofp %72 : i32 to f32
    %74 = arith.addf %11, %73 : f32
    %75 = vector.broadcast %74 : f32 to vector<8x128xf32>
    %76 = vector.broadcast %cst_18 : f32 to vector<8x128xf32>
    %77 = arith.select %71, %75, %76 : vector<8x128xi1>, vector<8x128xf32>
    %78 = arith.minimumf %56, %77 : vector<8x128xf32>
    %cst_34 = arith.constant 0.000000e+00 : f32
    %79 = vector.broadcast %cst_34 : f32 to vector<8x128xf32>
    %80 = arith.select %71, %79, %63 : vector<8x128xi1>, vector<8x128xf32>
    %c3_i32 = arith.constant 3 : i32
    %81 = vector.broadcast %cst_15 : f32 to vector<8x128xf32>
    %82 = arith.mulf %81, %80 : vector<8x128xf32>
    %83 = vector.broadcast %cst_16 : f32 to vector<8x128xf32>
    %84 = arith.mulf %83, %69 : vector<8x128xf32>
    %85 = arith.addf %82, %84 : vector<8x128xf32>
    %86 = vector.broadcast %cst_17 : f32 to vector<8x128xf32>
    %87 = arith.mulf %86, %69 : vector<8x128xf32>
    %88 = arith.index_cast %c3_i32 : i32 to index
    %c0_35 = arith.constant 0 : index
    %c0_36 = arith.constant 0 : index
    %89 = vector.load %arg8[%88, %c0_35, %c0_36] : memref<7x8x128xf32, #tpu.memory_space<vmem>>, vector<1x8x128xf32>
    %90 = vector.shape_cast %89 : vector<1x8x128xf32> to vector<8x128xf32>
    %91 = arith.addf %87, %90 : vector<8x128xf32>
    %cst_37 = arith.constant 1.000000e+00 : f32
    %92 = vector.broadcast %cst_37 : f32 to vector<8x128xf32>
    %93 = arith.cmpf ogt, %85, %92 : vector<8x128xf32>
    %c1_i32_38 = arith.constant 1 : i32
    %94 = arith.addi %c3_i32, %c1_i32_38 : i32
    %95 = arith.sitofp %94 : i32 to f32
    %96 = arith.addf %11, %95 : f32
    %97 = vector.broadcast %96 : f32 to vector<8x128xf32>
    %98 = vector.broadcast %cst_18 : f32 to vector<8x128xf32>
    %99 = arith.select %93, %97, %98 : vector<8x128xi1>, vector<8x128xf32>
    %100 = arith.minimumf %78, %99 : vector<8x128xf32>
    %cst_39 = arith.constant 0.000000e+00 : f32
    %101 = vector.broadcast %cst_39 : f32 to vector<8x128xf32>
    %102 = arith.select %93, %101, %85 : vector<8x128xi1>, vector<8x128xf32>
    %c4_i32 = arith.constant 4 : i32
    %103 = vector.broadcast %cst_15 : f32 to vector<8x128xf32>
    %104 = arith.mulf %103, %102 : vector<8x128xf32>
    %105 = vector.broadcast %cst_16 : f32 to vector<8x128xf32>
    %106 = arith.mulf %105, %91 : vector<8x128xf32>
    %107 = arith.addf %104, %106 : vector<8x128xf32>
    %108 = vector.broadcast %cst_17 : f32 to vector<8x128xf32>
    %109 = arith.mulf %108, %91 : vector<8x128xf32>
    %110 = arith.index_cast %c4_i32 : i32 to index
    %c0_40 = arith.constant 0 : index
    %c0_41 = arith.constant 0 : index
    %111 = vector.load %arg8[%110, %c0_40, %c0_41] : memref<7x8x128xf32, #tpu.memory_space<vmem>>, vector<1x8x128xf32>
    %112 = vector.shape_cast %111 : vector<1x8x128xf32> to vector<8x128xf32>
    %113 = arith.addf %109, %112 : vector<8x128xf32>
    %cst_42 = arith.constant 1.000000e+00 : f32
    %114 = vector.broadcast %cst_42 : f32 to vector<8x128xf32>
    %115 = arith.cmpf ogt, %107, %114 : vector<8x128xf32>
    %c1_i32_43 = arith.constant 1 : i32
    %116 = arith.addi %c4_i32, %c1_i32_43 : i32
    %117 = arith.sitofp %116 : i32 to f32
    %118 = arith.addf %11, %117 : f32
    %119 = vector.broadcast %118 : f32 to vector<8x128xf32>
    %120 = vector.broadcast %cst_18 : f32 to vector<8x128xf32>
    %121 = arith.select %115, %119, %120 : vector<8x128xi1>, vector<8x128xf32>
    %122 = arith.minimumf %100, %121 : vector<8x128xf32>
    %cst_44 = arith.constant 0.000000e+00 : f32
    %123 = vector.broadcast %cst_44 : f32 to vector<8x128xf32>
    %124 = arith.select %115, %123, %107 : vector<8x128xi1>, vector<8x128xf32>
    %c5_i32 = arith.constant 5 : i32
    %125 = vector.broadcast %cst_15 : f32 to vector<8x128xf32>
    %126 = arith.mulf %125, %124 : vector<8x128xf32>
    %127 = vector.broadcast %cst_16 : f32 to vector<8x128xf32>
    %128 = arith.mulf %127, %113 : vector<8x128xf32>
    %129 = arith.addf %126, %128 : vector<8x128xf32>
    %130 = vector.broadcast %cst_17 : f32 to vector<8x128xf32>
    %131 = arith.mulf %130, %113 : vector<8x128xf32>
    %132 = arith.index_cast %c5_i32 : i32 to index
    %c0_45 = arith.constant 0 : index
    %c0_46 = arith.constant 0 : index
    %133 = vector.load %arg8[%132, %c0_45, %c0_46] : memref<7x8x128xf32, #tpu.memory_space<vmem>>, vector<1x8x128xf32>
    %134 = vector.shape_cast %133 : vector<1x8x128xf32> to vector<8x128xf32>
    %135 = arith.addf %131, %134 : vector<8x128xf32>
    %cst_47 = arith.constant 1.000000e+00 : f32
    %136 = vector.broadcast %cst_47 : f32 to vector<8x128xf32>
    %137 = arith.cmpf ogt, %129, %136 : vector<8x128xf32>
    %c1_i32_48 = arith.constant 1 : i32
    %138 = arith.addi %c5_i32, %c1_i32_48 : i32
    %139 = arith.sitofp %138 : i32 to f32
    %140 = arith.addf %11, %139 : f32
    %141 = vector.broadcast %140 : f32 to vector<8x128xf32>
    %142 = vector.broadcast %cst_18 : f32 to vector<8x128xf32>
    %143 = arith.select %137, %141, %142 : vector<8x128xi1>, vector<8x128xf32>
    %144 = arith.minimumf %122, %143 : vector<8x128xf32>
    %cst_49 = arith.constant 0.000000e+00 : f32
    %145 = vector.broadcast %cst_49 : f32 to vector<8x128xf32>
    %146 = arith.select %137, %145, %129 : vector<8x128xi1>, vector<8x128xf32>
    %c6_i32 = arith.constant 6 : i32
    %147 = vector.broadcast %cst_15 : f32 to vector<8x128xf32>
    %148 = arith.mulf %147, %146 : vector<8x128xf32>
    %149 = vector.broadcast %cst_16 : f32 to vector<8x128xf32>
    %150 = arith.mulf %149, %135 : vector<8x128xf32>
    %151 = arith.addf %148, %150 : vector<8x128xf32>
    %152 = vector.broadcast %cst_17 : f32 to vector<8x128xf32>
    %153 = arith.mulf %152, %135 : vector<8x128xf32>
    %154 = arith.index_cast %c6_i32 : i32 to index
    %c0_50 = arith.constant 0 : index
    %c0_51 = arith.constant 0 : index
    %155 = vector.load %arg8[%154, %c0_50, %c0_51] : memref<7x8x128xf32, #tpu.memory_space<vmem>>, vector<1x8x128xf32>
    %156 = vector.shape_cast %155 : vector<1x8x128xf32> to vector<8x128xf32>
    %157 = arith.addf %153, %156 : vector<8x128xf32>
    %cst_52 = arith.constant 1.000000e+00 : f32
    %158 = vector.broadcast %cst_52 : f32 to vector<8x128xf32>
    %159 = arith.cmpf ogt, %151, %158 : vector<8x128xf32>
    %c1_i32_53 = arith.constant 1 : i32
    %160 = arith.addi %c6_i32, %c1_i32_53 : i32
    %161 = arith.sitofp %160 : i32 to f32
    %162 = arith.addf %11, %161 : f32
    %163 = vector.broadcast %162 : f32 to vector<8x128xf32>
    %164 = vector.broadcast %cst_18 : f32 to vector<8x128xf32>
    %165 = arith.select %159, %163, %164 : vector<8x128xi1>, vector<8x128xf32>
    %166 = arith.minimumf %144, %165 : vector<8x128xf32>
    %cst_54 = arith.constant 0.000000e+00 : f32
    %167 = vector.broadcast %cst_54 : f32 to vector<8x128xf32>
    %168 = arith.select %159, %167, %151 : vector<8x128xi1>, vector<8x128xf32>
    %c7_i32_55 = arith.constant 7 : i32
    %c0_56 = arith.constant 0 : index
    %c0_57 = arith.constant 0 : index
    %169 = vector.load %arg6[%c0_56, %c0_57] : memref<8x128xf32, #tpu.memory_space<vmem>>, vector<8x128xf32>
    tpu.vector_store %arg6[%c0_56, %c0_57], %168 {strides = array<i32>} : memref<8x128xf32, #tpu.memory_space<vmem>>, vector<8x128xf32>,
    %c0_58 = arith.constant 0 : index
    %c0_59 = arith.constant 0 : index
    %170 = vector.load %arg7[%c0_58, %c0_59] : memref<8x128xf32, #tpu.memory_space<vmem>>, vector<8x128xf32>
    tpu.vector_store %arg7[%c0_58, %c0_59], %157 {strides = array<i32>} : memref<8x128xf32, #tpu.memory_space<vmem>>, vector<8x128xf32>,
    %c0_60 = arith.constant 0 : index
    %c0_61 = arith.constant 0 : index
    %171 = vector.load %arg5[%c0_60, %c0_61] : memref<8x128xf32, #tpu.memory_space<vmem>>, vector<8x128xf32>
    tpu.vector_store %arg5[%c0_60, %c0_61], %166 {strides = array<i32>} : memref<8x128xf32, #tpu.memory_space<vmem>>, vector<8x128xf32>,
    return
  }
  func.func @transform_0(%arg0: i32, %arg1: i32, %arg2: i32) -> (i32, i32, i32) {
    %c0_i32 = arith.constant 0 : i32
    %c0_i32_0 = arith.constant 0 : i32
    return %arg2, %arg0, %c0_i32 : i32, i32, i32
  }
  func.func @transform_1(%arg0: i32, %arg1: i32, %arg2: i32) -> (i32, i32) {
    %c0_i32 = arith.constant 0 : i32
    %c0_i32_0 = arith.constant 0 : i32
    return %c0_i32, %arg1 : i32, i32
  }
  func.func @transform_2(%arg0: i32, %arg1: i32, %arg2: i32) -> (i32, i32) {
    %c0_i32 = arith.constant 0 : i32
    return %arg0, %arg1 : i32, i32
  }
}

</mosaic_0001>

<llo_original>
// kernel: tpu_custom_call.1
$region0: #{tpu_custom_call.1}
  #allocation0 [shape = 'u32[]', space=smem, size = 0x4, offset = 0x4, fixed_abs, tag = 'smem constant byte address 0x4 - core index']
  #allocation1 [shape = 'u32[144,128]{1,0:T(1,128)}', space=vmem, size = 0x12000, scoped, tag = 'internal scratch']
  #allocation2 [shape = 'f32[8,128]{1,0:T(8,128)}', space=vmem, size = 0x1000, scoped, tag = 'scratch operand']
  #allocation3 [shape = 'f32[8,128]{1,0:T(8,128)}', space=vmem, size = 0x1000, scoped, tag = 'scratch operand']
  #allocation4 [shape = 'f32[7,8,128]{2,1,0:T(8,128)}', space=vmem, size = 0x7000, scoped, tag = 'scratch operand']
  %s0 = inlined_call_operand.hbm [shape: bf16[7,8,128], index: 0, kind: input, shape index: {}]
  %s1 = inlined_call_operand.hbm [shape: f32[128,128], index: 1, kind: input, shape index: {}]
  %s2 = inlined_call_operand.hbm [shape: f32[8,128], index: 2, kind: output, shape index: {}]
  %s3 = sld [smem:[#allocation0]]
  $region30: #{tpu_custom_call.1} parent=0
    _
  %s5 = ssub.s32 1, %s3
  %s6 = scalar_select 0, %s5, %s3
  $region1: #{tpu_custom_call.1} parent=0
    #allocation5 [shape = 'u8[14336]{0}', space=vmem, size = 0x3800, scoped, tag = 'input window, operand 0, single buffered']
    #allocation6 [shape = 's32[1]{0}', space=sflag, size = 0x4, scoped, tag = 'scoped memory for tpu_custom_call.1']
    #allocation7 [shape = 's32[1]{0}', space=sflag, size = 0x4, scoped, tag = 'scoped memory for tpu_custom_call.1']
    #allocation8 [shape = 'u8[65536]{0}', space=vmem, size = 0x10000, scoped, tag = 'input window, operand 1, single buffered']
    #allocation9 [shape = 's32[1]{0}', space=sflag, size = 0x4, scoped, tag = 'scoped memory for tpu_custom_call.1']
    #allocation10 [shape = 'u8[4096]{0}', space=vmem, size = 0x1000, scoped, tag = 'output window, operand 0, single buffered']
    %7 = vsyncpa [#allocation6], 0
    %8 = vsyncpa [#allocation9], 0
    %9 = vsyncpa [#allocation7], 0
    // Predicated region
    $region2: #{tpu_custom_call.1} parent=1 // pred_check
      _
    $region3: #{tpu_custom_call.1} parent=1 // pred_check_branch
      %11 = sbr.rel (0) target = $region5
    $region4: #{tpu_custom_call.1} parent=1 // pred_region
      %s13 = ssub.s32 448, 448
      %14 = vsyncadd [#allocation6], %s13
      %s15 = sshll.u32 [#allocation5], 4
      %s16 = int_to_ptr.vmem [resolvable:$true] %s15
      %21 = dma.hbm_to_vmem [thread:$0]  %s0, 448, %s16, [#allocation6], 64, 64, 4
    $region5: #{tpu_custom_call.1} parent=1 // pred_fallthru
      _
    // Predicated region
    $region6: #{tpu_custom_call.1} parent=1 // pred_check
      _
    $region7: #{tpu_custom_call.1} parent=1 // pred_check_branch
      %23 = sbr.rel (0) target = $region9
    $region8: #{tpu_custom_call.1} parent=1 // pred_region
      %s25 = ssub.s32 2048, 2048
      %26 = vsyncadd [#allocation9], %s25
      %s27 = sshll.u32 [#allocation8], 4
      %s28 = int_to_ptr.vmem [resolvable:$true] %s27
      %33 = dma.hbm_to_vmem [thread:$0]  %s1, 2048, %s28, [#allocation9], 128, 128, 8
    $region9: #{tpu_custom_call.1} parent=1 // pred_fallthru
      _
    // Predicated region
    $region10: #{tpu_custom_call.1} parent=1 // pred_check
      _
    $region11: #{tpu_custom_call.1} parent=1 // pred_check_branch
      %35 = sbr.rel (0) target = $region13
    $region12: #{tpu_custom_call.1} parent=1 // pred_region
      %36 = dma.done [#allocation6], 448
    $region13: #{tpu_custom_call.1} parent=1 // pred_fallthru
      _
    // Predicated region
    $region14: #{tpu_custom_call.1} parent=1 // pred_check
      _
    $region15: #{tpu_custom_call.1} parent=1 // pred_check_branch
      %38 = sbr.rel (0) target = $region17
    $region16: #{tpu_custom_call.1} parent=1 // pred_region
      %39 = dma.done [#allocation9], 2048
    $region17: #{tpu_custom_call.1} parent=1 // pred_fallthru
      _
    %p40 = scmp.eq.s32.totalorder 0, 0
    // Predicated region
    $region18: #{tpu_custom_call.1} parent=1 // pred_check
      %p41 = pneg %p40
    $region19: #{tpu_custom_call.1} parent=1 // pred_check_branch
      %43 = sbr.rel (%p41) target = $region21
    $region20: #{tpu_custom_call.1} parent=1 // pred_region
      %44 = vst [vmem:[#allocation2] sm:$0xff] 0.0
      %45 = vst [vmem:[#allocation3] sm:$0xff] 0.0
      %46 = vst [vmem:[#allocation10] sm:$0xff] 7.0
    $region21: #{tpu_custom_call.1} parent=1 // pred_fallthru
      _
    %v47 = vld [vmem:[#allocation5] sm:$0xf]
    %v48 = vld [vmem:[#allocation5 + $0x4] sm:$0xf]
    %v49 = vld [vmem:[#allocation5 + $0x8] sm:$0xf]
    %v50 = vld [vmem:[#allocation5 + $0xc] sm:$0xf]
    %v51 = vld [vmem:[#allocation5 + $0x10] sm:$0xf]
    %v52 = vld [vmem:[#allocation5 + $0x14] sm:$0xf]
    %v53 = vld [vmem:[#allocation5 + $0x18] sm:$0xf]
    %v54 = vunpack.c.l.bf16 %v47
    %v55 = vunpack.c.l.bf16 %v48
    %v56 = vunpack.c.l.bf16 %v49
    %v57 = vunpack.c.l.bf16 %v50
    %v58 = vunpack.c.l.bf16 %v51
    %v59 = vunpack.c.l.bf16 %v52
    %v60 = vunpack.c.l.bf16 %v53
    %v61 = vld [vmem:[#allocation8] sm:$0xff]
    %v62 = vld [vmem:[#allocation8 + $0x8] sm:$0xff]
    %v63 = vld [vmem:[#allocation8 + $0x10] sm:$0xff]
    %v64 = vld [vmem:[#allocation8 + $0x18] sm:$0xff]
    %v65 = vld [vmem:[#allocation8 + $0x20] sm:$0xff]
    %v66 = vld [vmem:[#allocation8 + $0x28] sm:$0xff]
    %v67 = vld [vmem:[#allocation8 + $0x30] sm:$0xff]
    %v68 = vld [vmem:[#allocation8 + $0x38] sm:$0xff]
    %v69 = vld [vmem:[#allocation8 + $0x40] sm:$0xff]
    %v70 = vld [vmem:[#allocation8 + $0x48] sm:$0xff]
    %v71 = vld [vmem:[#allocation8 + $0x50] sm:$0xff]
    %v72 = vld [vmem:[#allocation8 + $0x58] sm:$0xff]
    %v73 = vld [vmem:[#allocation8 + $0x60] sm:$0xff]
    %v74 = vld [vmem:[#allocation8 + $0x68] sm:$0xff]
    %v75 = vld [vmem:[#allocation8 + $0x70] sm:$0xff]
    %v76 = vld [vmem:[#allocation8 + $0x78] sm:$0xff]
    %77 = vmatprep.subr.mxu0 0.0
    %78 = vmatpush1.msra.mxu0 %v61
    %79 = vmatprep.subr.mxu0 0.0
    %80 = vmatpush1.msra.mxu0 %v62
    %81 = vmatprep.subr.mxu0 0.0
    %82 = vmatpush1.msra.mxu0 %v63
    %83 = vmatprep.subr.mxu0 0.0
    %84 = vmatpush1.msra.mxu0 %v64
    %85 = vmatprep.subr.mxu0 0.0
    %86 = vmatpush1.msra.mxu0 %v65
    %87 = vmatprep.subr.mxu0 0.0
    %88 = vmatpush1.msra.mxu0 %v66
    %89 = vmatprep.subr.mxu0 0.0
    %90 = vmatpush1.msra.mxu0 %v67
    %91 = vmatprep.subr.mxu0 0.0
    %92 = vmatpush1.msra.mxu0 %v68
    %93 = vmatprep.subr.mxu0 0.0
    %94 = vmatpush1.msra.mxu0 %v69
    %95 = vmatprep.subr.mxu0 0.0
    %96 = vmatpush1.msra.mxu0 %v70
    %97 = vmatprep.subr.mxu0 0.0
    %98 = vmatpush1.msra.mxu0 %v71
    %99 = vmatprep.subr.mxu0 0.0
    %100 = vmatpush1.msra.mxu0 %v72
    %101 = vmatprep.subr.mxu0 0.0
    %102 = vmatpush1.msra.mxu0 %v73
    %103 = vmatprep.subr.mxu0 0.0
    %104 = vmatpush1.msra.mxu0 %v74
    %105 = vmatprep.subr.mxu0 0.0
    %106 = vmatpush1.msra.mxu0 %v75
    %107 = vmatprep.subr.mxu0 0.0
    %108 = vmatpush1.msra.mxu0 %v76
    %109 = vmatprep.subr.mxu0 0.0
    %110 = vmatpush1.msra.mxu0 0.0
    %111 = vmatprep.subr.mxu0 0.0
    %112 = vmatpush1.msra.mxu0 0.0
    %113 = vmatprep.subr.mxu0 0.0
    %114 = vmatpush1.msra.mxu0 0.0
    %115 = vmatprep.subr.mxu0 0.0
    %116 = vmatpush1.msra.mxu0 0.0
    %117 = vmatprep.subr.mxu0 0.0
    %118 = vmatpush1.msra.mxu0 0.0
    %119 = vmatprep.subr.mxu0 0.0
    %120 = vmatpush1.msra.mxu0 0.0
    %121 = vmatprep.subr.mxu0 0.0
    %122 = vmatpush1.msra.mxu0 0.0
    %123 = vmatprep.subr.mxu0 0.0
    %124 = vmatpush1.msra.mxu0 0.0
    %125 = vmatprep.subr.mxu0 0.0
    %126 = vmatpush1.msra.mxu0 0.0
    %127 = vmatprep.subr.mxu0 0.0
    %128 = vmatpush1.msra.mxu0 0.0
    %129 = vmatprep.subr.mxu0 0.0
    %130 = vmatpush1.msra.mxu0 0.0
    %131 = vmatprep.subr.mxu0 0.0
    %132 = vmatpush1.msra.mxu0 0.0
    %133 = vmatprep.subr.mxu0 0.0
    %134 = vmatpush1.msra.mxu0 0.0
    %135 = vmatprep.subr.mxu0 0.0
    %136 = vmatpush1.msra.mxu0 0.0
    %137 = vmatprep.subr.mxu0 0.0
    %138 = vmatpush1.msra.mxu0 0.0
    %139 = vmatprep.subr.mxu0 0.0
    %140 = vmatpush1.msra.mxu0 0.0
    %141 = vmatprep.mubr.f32.mxu0 0.0
    %142 = vmatmul.mubr.f32.gmra.mrb[0].mxu0 %v54
    %v143 = vpop.f32.mrb[0].mxu0
    %v144 = vadd.f32 0.0, %v143
    %v145 = vpop.f32.mrb[0].mxu0
    %146 = vmatprep.mubr.f32.mxu0 0.0
    %147 = vmatmul.mubr.f32.gmra.mrb[0].mxu0 %v55
    %v148 = vpop.f32.mrb[0].mxu0
    %v149 = vadd.f32 0.0, %v148
    %v150 = vpop.f32.mrb[0].mxu0
    %151 = vmatprep.mubr.f32.mxu0 0.0
    %152 = vmatmul.mubr.f32.gmra.mrb[0].mxu0 %v56
    %v153 = vpop.f32.mrb[0].mxu0
    %v154 = vadd.f32 0.0, %v153
    %v155 = vpop.f32.mrb[0].mxu0
    %156 = vmatprep.mubr.f32.mxu0 0.0
    %157 = vmatmul.mubr.f32.gmra.mrb[0].mxu0 %v57
    %v158 = vpop.f32.mrb[0].mxu0
    %v159 = vadd.f32 0.0, %v158
    %v160 = vpop.f32.mrb[0].mxu0
    %161 = vmatprep.mubr.f32.mxu0 0.0
    %162 = vmatmul.mubr.f32.gmra.mrb[0].mxu0 %v58
    %v163 = vpop.f32.mrb[0].mxu0
    %v164 = vadd.f32 0.0, %v163
    %v165 = vpop.f32.mrb[0].mxu0
    %166 = vmatprep.mubr.f32.mxu0 0.0
    %167 = vmatmul.mubr.f32.gmra.mrb[0].mxu0 %v59
    %v168 = vpop.f32.mrb[0].mxu0
    %v169 = vadd.f32 0.0, %v168
    %v170 = vpop.f32.mrb[0].mxu0
    %171 = vmatprep.mubr.f32.mxu0 0.0
    %172 = vmatmul.mubr.f32.gmra.mrb[0].mxu0 %v60
    %v173 = vpop.f32.mrb[0].mxu0
    %v174 = vadd.f32 0.0, %v173
    %v175 = vpop.f32.mrb[0].mxu0
    %176 = vdwg.mxu0
    %177 = vst [vmem:[#allocation4] sm:$0xff] %v144
    %178 = vst [vmem:[#allocation4 + $0x8] sm:$0xff] %v149
    %179 = vst [vmem:[#allocation4 + $0x10] sm:$0xff] %v154
    %180 = vst [vmem:[#allocation4 + $0x18] sm:$0xff] %v159
    %181 = vst [vmem:[#allocation4 + $0x20] sm:$0xff] %v164
    %182 = vst [vmem:[#allocation4 + $0x28] sm:$0xff] %v169
    %183 = vst [vmem:[#allocation4 + $0x30] sm:$0xff] %v174
    %s184 = smul.u32 0, 7
    %s185 = scvt.s32.f32 %s184
    %v186 = vld [vmem:[#allocation2] sm:$0xff]
    %v187 = vld [vmem:[#allocation3] sm:$0xff]
    %v188 = vld [vmem:[#allocation10] sm:$0xff]
    %v189 = vmul.f32 %v186, 0.75
    %v190 = vmul.f32 %v187, 0.25
    %v191 = vadd.f32 %v189, %v190
    %v192 = vmul.f32 %v187, 0.5
    %v193 = vld [vmem:[#allocation4] sm:$0xff]
    %v194 = vadd.f32 %v192, %v193
    %vm195 = vcmp.gt.f32.partialorder %v191, 1.0
    %s196 = sadd.f32 %s185, 1.0
    %v197 = vstv %s196
    %v198 = vsel %vm195, %v197, 7.0
    %v199 = vmin.f32 %v188, %v198
    %v200 = vsel %vm195, 0.0, %v191
    %v201 = vmul.f32 %v200, 0.75
    %v202 = vmul.f32 %v194, 0.25
    %v203 = vadd.f32 %v201, %v202
    %v204 = vmul.f32 %v194, 0.5
    %s205 = scalar_lea.vmem [#allocation4], 8
    %v206 = vld [vmem:[%s205] sm:$0xff]
    %v207 = vadd.f32 %v204, %v206
    %vm208 = vcmp.gt.f32.partialorder %v203, 1.0
    %s209 = sadd.f32 %s185, 2.0
    %v210 = vstv %s209
    %v211 = vsel %vm208, %v210, 7.0
    %v212 = vmin.f32 %v199, %v211
    %v213 = vsel %vm208, 0.0, %v203
    %v214 = vmul.f32 %v213, 0.75
    %v215 = vmul.f32 %v207, 0.25
    %v216 = vadd.f32 %v214, %v215
    %v217 = vmul.f32 %v207, 0.5
    %s218 = scalar_lea.vmem [#allocation4], 16
    %v219 = vld [vmem:[%s218] sm:$0xff]
    %v220 = vadd.f32 %v217, %v219
    %vm221 = vcmp.gt.f32.partialorder %v216, 1.0
    %s222 = sadd.f32 %s185, 3.0
    %v223 = vstv %s222
    %v224 = vsel %vm221, %v223, 7.0
    %v225 = vmin.f32 %v212, %v224
    %v226 = vsel %vm221, 0.0, %v216
    %v227 = vmul.f32 %v226, 0.75
    %v228 = vmul.f32 %v220, 0.25
    %v229 = vadd.f32 %v227, %v228
    %v230 = vmul.f32 %v220, 0.5
    %s231 = scalar_lea.vmem [#allocation4], 24
    %v232 = vld [vmem:[%s231] sm:$0xff]
    %v233 = vadd.f32 %v230, %v232
    %vm234 = vcmp.gt.f32.partialorder %v229, 1.0
    %s235 = sadd.f32 %s185, 4.0
    %v236 = vstv %s235
    %v237 = vsel %vm234, %v236, 7.0
    %v238 = vmin.f32 %v225, %v237
    %v239 = vsel %vm234, 0.0, %v229
    %v240 = vmul.f32 %v239, 0.75
    %v241 = vmul.f32 %v233, 0.25
    %v242 = vadd.f32 %v240, %v241
    %v243 = vmul.f32 %v233, 0.5
    %s244 = scalar_lea.vmem [#allocation4], 32
    %v245 = vld [vmem:[%s244] sm:$0xff]
    %v246 = vadd.f32 %v243, %v245
    %vm247 = vcmp.gt.f32.partialorder %v242, 1.0
    %s248 = sadd.f32 %s185, 5.0
    %v249 = vstv %s248
    %v250 = vsel %vm247, %v249, 7.0
    %v251 = vmin.f32 %v238, %v250
    %v252 = vsel %vm247, 0.0, %v242
    %v253 = vmul.f32 %v252, 0.75
    %v254 = vmul.f32 %v246, 0.25
    %v255 = vadd.f32 %v253, %v254
    %v256 = vmul.f32 %v246, 0.5
    %s257 = scalar_lea.vmem [#allocation4], 40
    %v258 = vld [vmem:[%s257] sm:$0xff]
    %v259 = vadd.f32 %v256, %v258
    %vm260 = vcmp.gt.f32.partialorder %v255, 1.0
    %s261 = sadd.f32 %s185, 6.0
    %v262 = vstv %s261
    %v263 = vsel %vm260, %v262, 7.0
    %v264 = vmin.f32 %v251, %v263
    %v265 = vsel %vm260, 0.0, %v255
    %v266 = vmul.f32 %v265, 0.75
    %v267 = vmul.f32 %v259, 0.25
    %v268 = vadd.f32 %v266, %v267
    %v269 = vmul.f32 %v259, 0.5
    %s270 = scalar_lea.vmem [#allocation4], 48
    %v271 = vld [vmem:[%s270] sm:$0xff]
    %v272 = vadd.f32 %v269, %v271
    %vm273 = vcmp.gt.f32.partialorder %v268, 1.0
    %s274 = sadd.f32 %s185, 7.0
    %v275 = vstv %s274
    %v276 = vsel %vm273, %v275, 7.0
    %v277 = vmin.f32 %v264, %v276
    %v278 = vsel %vm273, 0.0, %v268
    %279 = vst [vmem:[#allocation2] sm:$0xff] %v278
    %280 = vst [vmem:[#allocation3] sm:$0xff] %v272
    %281 = vst [vmem:[#allocation10] sm:$0xff] %v277
    // Predicated region
    $region22: #{tpu_custom_call.1} parent=1 // pred_check
      _
    $region23: #{tpu_custom_call.1} parent=1 // pred_check_branch
      %283 = sbr.rel (0) target = $region25
    $region24: #{tpu_custom_call.1} parent=1 // pred_region
      %s285 = ssub.s32 128, 128
      %286 = vsyncadd [#allocation7], %s285
      %s288 = sshll.u32 [#allocation10], 4
      %s289 = int_to_ptr.vmem [resolvable:$true] %s288
      %291 = dma.vmem_to_hbm [thread:$0]  %s289, 128, %s2, [#allocation7]
    $region25: #{tpu_custom_call.1} parent=1 // pred_fallthru
      _
    // Predicated region
    $region26: #{tpu_custom_call.1} parent=1 // pred_check
      _
    $region27: #{tpu_custom_call.1} parent=1 // pred_check_branch
      %293 = sbr.rel (0) target = $region29
    $region28: #{tpu_custom_call.1} parent=1 // pred_region
      %294 = dma.done [#allocation7], 128
    $region29: #{tpu_custom_call.1} parent=1 // pred_fallthru
      _
    %295 = vsyncpa [#allocation6], 1
    %296 = vsyncpa [#allocation9], 1
    %297 = vsyncpa [#allocation7], 1

// kernel: tpu_custom_call.1
$region0: #{tpu_custom_call.1}
  #allocation0 [shape = 'u32[]', space=smem, size = 0x4, offset = 0x4, fixed_abs, tag = 'smem constant byte address 0x4 - core index']
  #allocation1 [shape = 'u32[144,128]{1,0:T(1,128)}', space=vmem, size = 0x12000, scoped, tag = 'internal scratch']
  #allocation2 [shape = 'f32[8,128]{1,0:T(8,128)}', space=vmem, size = 0x1000, scoped, tag = 'scratch operand']
  #allocation3 [shape = 'f32[8,128]{1,0:T(8,128)}', space=vmem, size = 0x1000, scoped, tag = 'scratch operand']
  #allocation4 [shape = 'f32[7,8,128]{2,1,0:T(8,128)}', space=vmem, size = 0x7000, scoped, tag = 'scratch operand']
  %s0 = inlined_call_operand.hbm [shape: bf16[7,8,128], index: 0, kind: input, shape index: {}]
  %s1 = inlined_call_operand.hbm [shape: f32[128,128], index: 1, kind: input, shape index: {}]
  %s2 = inlined_call_operand.hbm [shape: f32[8,128], index: 2, kind: output, shape index: {}]
  %s3 = sld [smem:[#allocation0]]
  $region30: #{tpu_custom_call.1} parent=0
    _
  %s5 = ssub.s32 1, %s3
  %s6 = scalar_select 0, %s5, %s3
  $region1: #{tpu_custom_call.1} parent=0
    #allocation5 [shape = 'u8[14336]{0}', space=vmem, size = 0x3800, scoped, tag = 'input window, operand 0, single buffered']
    #allocation6 [shape = 's32[1]{0}', space=sflag, size = 0x4, scoped, tag = 'scoped memory for tpu_custom_call.1']
    #allocation7 [shape = 's32[1]{0}', space=sflag, size = 0x4, scoped, tag = 'scoped memory for tpu_custom_call.1']
    #allocation8 [shape = 'u8[65536]{0}', space=vmem, size = 0x10000, scoped, tag = 'input window, operand 1, single buffered']
    #allocation9 [shape = 's32[1]{0}', space=sflag, size = 0x4, scoped, tag = 'scoped memory for tpu_custom_call.1']
    #allocation10 [shape = 'u8[4096]{0}', space=vmem, size = 0x1000, scoped, tag = 'output window, operand 0, single buffered']
    %7 = vsyncpa [#allocation6], 0
    %8 = vsyncpa [#allocation9], 0
    %9 = vsyncpa [#allocation7], 0
    // Predicated region
    $region2: #{tpu_custom_call.1} parent=1 // pred_check
      _
    $region3: #{tpu_custom_call.1} parent=1 // pred_check_branch
      %11 = sbr.rel (0) target = $region5
    $region4: #{tpu_custom_call.1} parent=1 // pred_region
      %s13 = ssub.s32 448, 448
      %14 = vsyncadd [#allocation6], %s13
      %s15 = sshll.u32 [#allocation5], 4
      %s16 = int_to_ptr.vmem [resolvable:$true] %s15
      %21 = dma.hbm_to_vmem [thread:$0]  %s0, 448, %s16, [#allocation6], 64, 64, 4
    $region5: #{tpu_custom_call.1} parent=1 // pred_fallthru
      _
    // Predicated region
    $region6: #{tpu_custom_call.1} parent=1 // pred_check
      _
    $region7: #{tpu_custom_call.1} parent=1 // pred_check_branch
      %23 = sbr.rel (0) target = $region9
    $region8: #{tpu_custom_call.1} parent=1 // pred_region
      %s25 = ssub.s32 2048, 2048
      %26 = vsyncadd [#allocation9], %s25
      %s27 = sshll.u32 [#allocation8], 4
      %s28 = int_to_ptr.vmem [resolvable:$true] %s27
      %33 = dma.hbm_to_vmem [thread:$0]  %s1, 2048, %s28, [#allocation9], 128, 128, 8
    $region9: #{tpu_custom_call.1} parent=1 // pred_fallthru
      _
    // Predicated region
    $region10: #{tpu_custom_call.1} parent=1 // pred_check
      _
    $region11: #{tpu_custom_call.1} parent=1 // pred_check_branch
      %35 = sbr.rel (0) target = $region13
    $region12: #{tpu_custom_call.1} parent=1 // pred_region
      %36 = dma.done [#allocation6], 448
    $region13: #{tpu_custom_call.1} parent=1 // pred_fallthru
      _
    // Predicated region
    $region14: #{tpu_custom_call.1} parent=1 // pred_check
      _
    $region15: #{tpu_custom_call.1} parent=1 // pred_check_branch
      %38 = sbr.rel (0) target = $region17
    $region16: #{tpu_custom_call.1} parent=1 // pred_region
      %39 = dma.done [#allocation9], 2048
    $region17: #{tpu_custom_call.1} parent=1 // pred_fallthru
      _
    %p40 = scmp.eq.s32.totalorder 0, 0
    // Predicated region
    $region18: #{tpu_custom_call.1} parent=1 // pred_check
      %p41 = pneg %p40
    $region19: #{tpu_custom_call.1} parent=1 // pred_check_branch
      %43 = sbr.rel (%p41) target = $region21
    $region20: #{tpu_custom_call.1} parent=1 // pred_region
      %44 = vst [vmem:[#allocation2] sm:$0xff] 0.0
      %45 = vst [vmem:[#allocation3] sm:$0xff] 0.0
      %46 = vst [vmem:[#allocation10] sm:$0xff] 7.0
    $region21: #{tpu_custom_call.1} parent=1 // pred_fallthru
      _
    %v47 = vld [vmem:[#allocation5] sm:$0xf]
    %v48 = vld [vmem:[#allocation5 + $0x4] sm:$0xf]
    %v49 = vld [vmem:[#allocation5 + $0x8] sm:$0xf]
    %v50 = vld [vmem:[#allocation5 + $0xc] sm:$0xf]
    %v51 = vld [vmem:[#allocation5 + $0x10] sm:$0xf]
    %v52 = vld [vmem:[#allocation5 + $0x14] sm:$0xf]
    %v53 = vld [vmem:[#allocation5 + $0x18] sm:$0xf]
    %v54 = vunpack.c.l.bf16 %v47
    %v55 = vunpack.c.l.bf16 %v48
    %v56 = vunpack.c.l.bf16 %v49
    %v57 = vunpack.c.l.bf16 %v50
    %v58 = vunpack.c.l.bf16 %v51
    %v59 = vunpack.c.l.bf16 %v52
    %v60 = vunpack.c.l.bf16 %v53
    %v61 = vld [vmem:[#allocation8] sm:$0xff]
    %v62 = vld [vmem:[#allocation8 + $0x8] sm:$0xff]
    %v63 = vld [vmem:[#allocation8 + $0x10] sm:$0xff]
    %v64 = vld [vmem:[#allocation8 + $0x18] sm:$0xff]
    %v65 = vld [vmem:[#allocation8 + $0x20] sm:$0xff]
    %v66 = vld [vmem:[#allocation8 + $0x28] sm:$0xff]
    %v67 = vld [vmem:[#allocation8 + $0x30] sm:$0xff]
    %v68 = vld [vmem:[#allocation8 + $0x38] sm:$0xff]
    %v69 = vld [vmem:[#allocation8 + $0x40] sm:$0xff]
    %v70 = vld [vmem:[#allocation8 + $0x48] sm:$0xff]
    %v71 = vld [vmem:[#allocation8 + $0x50] sm:$0xff]
    %v72 = vld [vmem:[#allocation8 + $0x58] sm:$0xff]
    %v73 = vld [vmem:[#allocation8 + $0x60] sm:$0xff]
    %v74 = vld [vmem:[#allocation8 + $0x68] sm:$0xff]
    %v75 = vld [vmem:[#allocation8 + $0x70] sm:$0xff]
    %v76 = vld [vmem:[#allocation8 + $0x78] sm:$0xff]
    %77 = vmatprep.subr.mxu0 0.0
    %78 = vmatpush1.msra.mxu0 %v61
    %79 = vmatprep.subr.mxu0 0.0
    %80 = vmatpush1.msra.mxu0 %v62
    %81 = vmatprep.subr.mxu0 0.0
    %82 = vmatpush1.msra.mxu0 %v63
    %83 = vmatprep.subr.mxu0 0.0
    %84 = vmatpush1.msra.mxu0 %v64
    %85 = vmatprep.subr.mxu0 0.0
    %86 = vmatpush1.msra.mxu0 %v65
    %87 = vmatprep.subr.mxu0 0.0
    %88 = vmatpush1.msra.mxu0 %v66
    %89 = vmatprep.subr.mxu0 0.0
    %90 = vmatpush1.msra.mxu0 %v67
    %91 = vmatprep.subr.mxu0 0.0
    %92 = vmatpush1.msra.mxu0 %v68
    %93 = vmatprep.subr.mxu0 0.0
    %94 = vmatpush1.msra.mxu0 %v69
    %95 = vmatprep.subr.mxu0 0.0
    %96 = vmatpush1.msra.mxu0 %v70
    %97 = vmatprep.subr.mxu0 0.0
    %98 = vmatpush1.msra.mxu0 %v71
    %99 = vmatprep.subr.mxu0 0.0
    %100 = vmatpush1.msra.mxu0 %v72
    %101 = vmatprep.subr.mxu0 0.0
    %102 = vmatpush1.msra.mxu0 %v73
    %103 = vmatprep.subr.mxu0 0.0
    %104 = vmatpush1.msra.mxu0 %v74
    %105 = vmatprep.subr.mxu0 0.0
    %106 = vmatpush1.msra.mxu0 %v75
    %107 = vmatprep.subr.mxu0 0.0
    %108 = vmatpush1.msra.mxu0 %v76
    %109 = vmatprep.subr.mxu0 0.0
    %110 = vmatpush1.msra.mxu0 0.0
    %111 = vmatprep.subr.mxu0 0.0
    %112 = vmatpush1.msra.mxu0 0.0
    %113 = vmatprep.subr.mxu0 0.0
    %114 = vmatpush1.msra.mxu0 0.0
    %115 = vmatprep.subr.mxu0 0.0
    %116 = vmatpush1.msra.mxu0 0.0
    %117 = vmatprep.subr.mxu0 0.0
    %118 = vmatpush1.msra.mxu0 0.0
    %119 = vmatprep.subr.mxu0 0.0
    %120 = vmatpush1.msra.mxu0 0.0
    %121 = vmatprep.subr.mxu0 0.0
    %122 = vmatpush1.msra.mxu0 0.0
    %123 = vmatprep.subr.mxu0 0.0
    %124 = vmatpush1.msra.mxu0 0.0
    %125 = vmatprep.subr.mxu0 0.0
    %126 = vmatpush1.msra.mxu0 0.0
    %127 = vmatprep.subr.mxu0 0.0
    %128 = vmatpush1.msra.mxu0 0.0
    %129 = vmatprep.subr.mxu0 0.0
    %130 = vmatpush1.msra.mxu0 0.0
    %131 = vmatprep.subr.mxu0 0.0
    %132 = vmatpush1.msra.mxu0 0.0
    %133 = vmatprep.subr.mxu0 0.0
    %134 = vmatpush1.msra.mxu0 0.0
    %135 = vmatprep.subr.mxu0 0.0
    %136 = vmatpush1.msra.mxu0 0.0
    %137 = vmatprep.subr.mxu0 0.0
    %138 = vmatpush1.msra.mxu0 0.0
    %139 = vmatprep.subr.mxu0 0.0
    %140 = vmatpush1.msra.mxu0 0.0
    %141 = vmatprep.mubr.f32.mxu0 0.0
    %142 = vmatmul.mubr.f32.gmra.mrb[0].mxu0 %v54
    %v143 = vpop.f32.mrb[0].mxu0
    %v144 = vadd.f32 0.0, %v143
    %v145 = vpop.f32.mrb[0].mxu0
    %146 = vmatprep.mubr.f32.mxu0 0.0
    %147 = vmatmul.mubr.f32.gmra.mrb[0].mxu0 %v55
    %v148 = vpop.f32.mrb[0].mxu0
    %v149 = vadd.f32 0.0, %v148
    %v150 = vpop.f32.mrb[0].mxu0
    %151 = vmatprep.mubr.f32.mxu0 0.0
    %152 = vmatmul.mubr.f32.gmra.mrb[0].mxu0 %v56
    %v153 = vpop.f32.mrb[0].mxu0
    %v154 = vadd.f32 0.0, %v153
    %v155 = vpop.f32.mrb[0].mxu0
    %156 = vmatprep.mubr.f32.mxu0 0.0
    %157 = vmatmul.mubr.f32.gmra.mrb[0].mxu0 %v57
    %v158 = vpop.f32.mrb[0].mxu0
    %v159 = vadd.f32 0.0, %v158
    %v160 = vpop.f32.mrb[0].mxu0
    %161 = vmatprep.mubr.f32.mxu0 0.0
    %162 = vmatmul.mubr.f32.gmra.mrb[0].mxu0 %v58
    %v163 = vpop.f32.mrb[0].mxu0
    %v164 = vadd.f32 0.0, %v163
    %v165 = vpop.f32.mrb[0].mxu0
    %166 = vmatprep.mubr.f32.mxu0 0.0
    %167 = vmatmul.mubr.f32.gmra.mrb[0].mxu0 %v59
    %v168 = vpop.f32.mrb[0].mxu0
    %v169 = vadd.f32 0.0, %v168
    %v170 = vpop.f32.mrb[0].mxu0
    %171 = vmatprep.mubr.f32.mxu0 0.0
    %172 = vmatmul.mubr.f32.gmra.mrb[0].mxu0 %v60
    %v173 = vpop.f32.mrb[0].mxu0
    %v174 = vadd.f32 0.0, %v173
    %v175 = vpop.f32.mrb[0].mxu0
    %176 = vdwg.mxu0
    %177 = vst [vmem:[#allocation4] sm:$0xff] %v144
    %178 = vst [vmem:[#allocation4 + $0x8] sm:$0xff] %v149
    %179 = vst [vmem:[#allocation4 + $0x10] sm:$0xff] %v154
    %180 = vst [vmem:[#allocation4 + $0x18] sm:$0xff] %v159
    %181 = vst [vmem:[#allocation4 + $0x20] sm:$0xff] %v164
    %182 = vst [vmem:[#allocation4 + $0x28] sm:$0xff] %v169
    %183 = vst [vmem:[#allocation4 + $0x30] sm:$0xff] %v174
    %s184 = smul.u32 0, 7
    %s185 = scvt.s32.f32 %s184
    %v186 = vld [vmem:[#allocation2] sm:$0xff]
    %v187 = vld [vmem:[#allocation3] sm:$0xff]
    %v188 = vld [vmem:[#allocation10] sm:$0xff]
    %v189 = vmul.f32 %v186, 0.75
    %v190 = vmul.f32 %v187, 0.25
    %v191 = vadd.f32 %v189, %v190
    %v192 = vmul.f32 %v187, 0.5
    %v193 = vld [vmem:[#allocation4] sm:$0xff]
    %v194 = vadd.f32 %v192, %v193
    %vm195 = vcmp.gt.f32.partialorder %v191, 1.0
    %s196 = sadd.f32 %s185, 1.0
    %v197 = vstv %s196
    %v198 = vsel %vm195, %v197, 7.0
    %v199 = vmin.f32 %v188, %v198
    %v200 = vsel %vm195, 0.0, %v191
    %v201 = vmul.f32 %v200, 0.75
    %v202 = vmul.f32 %v194, 0.25
    %v203 = vadd.f32 %v201, %v202
    %v204 = vmul.f32 %v194, 0.5
    %s205 = scalar_lea.vmem [#allocation4], 8
    %v206 = vld [vmem:[%s205] sm:$0xff]
    %v207 = vadd.f32 %v204, %v206
    %vm208 = vcmp.gt.f32.partialorder %v203, 1.0
    %s209 = sadd.f32 %s185, 2.0
    %v210 = vstv %s209
    %v211 = vsel %vm208, %v210, 7.0
    %v212 = vmin.f32 %v199, %v211
    %v213 = vsel %vm208, 0.0, %v203
    %v214 = vmul.f32 %v213, 0.75
    %v215 = vmul.f32 %v207, 0.25
    %v216 = vadd.f32 %v214, %v215
    %v217 = vmul.f32 %v207, 0.5
    %s218 = scalar_lea.vmem [#allocation4], 16
    %v219 = vld [vmem:[%s218] sm:$0xff]
    %v220 = vadd.f32 %v217, %v219
    %vm221 = vcmp.gt.f32.partialorder %v216, 1.0
    %s222 = sadd.f32 %s185, 3.0
    %v223 = vstv %s222
    %v224 = vsel %vm221, %v223, 7.0
    %v225 = vmin.f32 %v212, %v224
    %v226 = vsel %vm221, 0.0, %v216
    %v227 = vmul.f32 %v226, 0.75
    %v228 = vmul.f32 %v220, 0.25
    %v229 = vadd.f32 %v227, %v228
    %v230 = vmul.f32 %v220, 0.5
    %s231 = scalar_lea.vmem [#allocation4], 24
    %v232 = vld [vmem:[%s231] sm:$0xff]
    %v233 = vadd.f32 %v230, %v232
    %vm234 = vcmp.gt.f32.partialorder %v229, 1.0
    %s235 = sadd.f32 %s185, 4.0
    %v236 = vstv %s235
    %v237 = vsel %vm234, %v236, 7.0
    %v238 = vmin.f32 %v225, %v237
    %v239 = vsel %vm234, 0.0, %v229
    %v240 = vmul.f32 %v239, 0.75
    %v241 = vmul.f32 %v233, 0.25
    %v242 = vadd.f32 %v240, %v241
    %v243 = vmul.f32 %v233, 0.5
    %s244 = scalar_lea.vmem [#allocation4], 32
    %v245 = vld [vmem:[%s244] sm:$0xff]
    %v246 = vadd.f32 %v243, %v245
    %vm247 = vcmp.gt.f32.partialorder %v242, 1.0
    %s248 = sadd.f32 %s185, 5.0
    %v249 = vstv %s248
    %v250 = vsel %vm247, %v249, 7.0
    %v251 = vmin.f32 %v238, %v250
    %v252 = vsel %vm247, 0.0, %v242
    %v253 = vmul.f32 %v252, 0.75
    %v254 = vmul.f32 %v246, 0.25
    %v255 = vadd.f32 %v253, %v254
    %v256 = vmul.f32 %v246, 0.5
    %s257 = scalar_lea.vmem [#allocation4], 40
    %v258 = vld [vmem:[%s257] sm:$0xff]
    %v259 = vadd.f32 %v256, %v258
    %vm260 = vcmp.gt.f32.partialorder %v255, 1.0
    %s261 = sadd.f32 %s185, 6.0
    %v262 = vstv %s261
    %v263 = vsel %vm260, %v262, 7.0
    %v264 = vmin.f32 %v251, %v263
    %v265 = vsel %vm260, 0.0, %v255
    %v266 = vmul.f32 %v265, 0.75
    %v267 = vmul.f32 %v259, 0.25
    %v268 = vadd.f32 %v266, %v267
    %v269 = vmul.f32 %v259, 0.5
    %s270 = scalar_lea.vmem [#allocation4], 48
    %v271 = vld [vmem:[%s270] sm:$0xff]
    %v272 = vadd.f32 %v269, %v271
    %vm273 = vcmp.gt.f32.partialorder %v268, 1.0
    %s274 = sadd.f32 %s185, 7.0
    %v275 = vstv %s274
    %v276 = vsel %vm273, %v275, 7.0
    %v277 = vmin.f32 %v264, %v276
    %v278 = vsel %vm273, 0.0, %v268
    %279 = vst [vmem:[#allocation2] sm:$0xff] %v278
    %280 = vst [vmem:[#allocation3] sm:$0xff] %v272
    %281 = vst [vmem:[#allocation10] sm:$0xff] %v277
    // Predicated region
    $region22: #{tpu_custom_call.1} parent=1 // pred_check
      _
    $region23: #{tpu_custom_call.1} parent=1 // pred_check_branch
      %283 = sbr.rel (0) target = $region25
    $region24: #{tpu_custom_call.1} parent=1 // pred_region
      %s285 = ssub.s32 128, 128
      %286 = vsyncadd [#allocation7], %s285
      %s288 = sshll.u32 [#allocation10], 4
      %s289 = int_to_ptr.vmem [resolvable:$true] %s288
      %291 = dma.vmem_to_hbm [thread:$0]  %s289, 128, %s2, [#allocation7]
    $region25: #{tpu_custom_call.1} parent=1 // pred_fallthru
      _
    // Predicated region
    $region26: #{tpu_custom_call.1} parent=1 // pred_check
      _
    $region27: #{tpu_custom_call.1} parent=1 // pred_check_branch
      %293 = sbr.rel (0) target = $region29
    $region28: #{tpu_custom_call.1} parent=1 // pred_region
      %294 = dma.done [#allocation7], 128
    $region29: #{tpu_custom_call.1} parent=1 // pred_fallthru
      _
    %295 = vsyncpa [#allocation6], 1
    %296 = vsyncpa [#allocation9], 1
    %297 = vsyncpa [#allocation7], 1

</llo_original>
